<compile_context>
chip_gen: v6e
topology: v6e:2x2x1
jax: 0.10.0
libtpu: 0.0.40
codegen_flags: <defaults>
</compile_context>

<pallas_src>
import functools
import math

import jax
import jax.numpy as jnp
from jax import lax
from jax.experimental import pallas as pl
from jax.experimental.pallas import tpu as pltpu

_INV_SQRT2 = 1.0 / math.sqrt(2.0)
_SQRT_2_OVER_PI = math.sqrt(2.0 / math.pi)


# ----------------------------- kernel -----------------------------------------
def transform_kernel(x_ref, w_ref, b_ref, gamma_ref, beta_ref, o_ref, *, use_tanh_gelu):
    # Dense: x @ W^T (W pre-transposed in prepare_params). The activation tile
    # is cast to the weight dtype so bf16 weights take the fast bf16 MXU path;
    # accumulation is always fp32 via preferred_element_type.
    h = jnp.dot(x_ref[...].astype(w_ref.dtype), w_ref[...],
                preferred_element_type=jnp.float32)
    h = h + b_ref[...].astype(jnp.float32)                       # bias [1, H]

    if use_tanh_gelu:
        # tanh-approx GELU: moves the transcendental to the EUP slot (useful if
        # the erf VALU polynomial is the binding slot on v6e/v7x). Numerics
        # differ slightly from the erf reference, so it is opt-in.
        h = 0.5 * h * (1.0 + jnp.tanh(_SQRT_2_OVER_PI * (h + 0.044715 * h * h * h)))
    else:
        # erf GELU — matches the PyTorch reference exactly.
        h = h * 0.5 * (1.0 + lax.erf(h * _INV_SQRT2))

    # BertLayerNorm (eps=1e-12), biased variance over the hidden axis.
    mu = jnp.mean(h, axis=-1, keepdims=True)
    var = jnp.mean(jnp.square(h - mu), axis=-1, keepdims=True)
    h = (h - mu) * lax.rsqrt(var + 1e-12)                        # rsqrt -> EUP slot
    h = h * gamma_ref[...].astype(jnp.float32) + beta_ref[...].astype(jnp.float32)

    o_ref[...] = h.astype(o_ref.dtype)


# ----------------------------- helpers -----------------------------------------
def _round_up(x, m):
    return ((x + m - 1) // m) * m


def prepare_params(params, *, matmul_dtype=jnp.bfloat16):
    """One-time parameter prep (call once, reuse every forward):
    transpose the dense weight (nn.Linear computes x @ W^T), cast it to
    `matmul_dtype` (bf16 by default: ~4x MXU throughput on v5e/v6e, half the
    resident VMEM and DMA bytes), and reshape the 1-D bias / LN vectors to
    lane-dense fp32 [1, H] rows."""
    H = params["dense_w"].shape[0]
    w_t = params["dense_w"].T
    if matmul_dtype is not None:
        w_t = w_t.astype(matmul_dtype)
    return {
        "dense_w_t": w_t,
        "dense_b": params["dense_b"].reshape(1, H).astype(jnp.float32),
        "ln_gamma": params["ln_gamma"].reshape(1, H).astype(jnp.float32),
        "ln_beta": params["ln_beta"].reshape(1, H).astype(jnp.float32),
    }


def _vmem_limit_bytes():
    """Portable scoped-VMEM limit: ~3/4 of the physical per-core VMEM
    (~96 MiB on v5e/v6e, ~48 MiB on v7x). Falls back to the conservative
    v7x-safe value if the hardware query is unavailable."""
    cap = None
    try:
        cap = getattr(pltpu.get_tpu_info(), "vmem_capacity_bytes", None)
    except Exception:
        cap = None
    if not cap:
        cap = 64 << 20
    return min((int(cap) * 3) // 4, 100 << 20)


def _pick_tile_m(M, H, x_itemsize, out_itemsize, w_itemsize, tm_req, vmem_limit):
    # dtype-aware minimum sublane tile: 8 rows f32, 16 bf16, 32 int8/fp8.
    rows_min = max(8, 32 // x_itemsize)
    tm = max(rows_min, _round_up(min(tm_req, _round_up(M, rows_min)), rows_min))
    # v7x has 2 TensorCores: keep >= 2 parallel grid steps whenever M allows
    # (shrink the tile rather than idling a core on a 1-step grid).
    if M > rows_min and pl.cdiv(M, tm) < 2:
        tm = max(rows_min, _round_up(pl.cdiv(M, 2), rows_min))
    # Fit double-buffered activation/output tiles plus the resident weight in
    # the scoped-VMEM budget (counts 2 weight buffers so the no-Buffered(1)
    # fallback also fits).
    fixed = 2 * H * H * w_itemsize + (4 << 20)
    per_row = 2 * H * (x_itemsize + out_itemsize)
    while tm > rows_min and fixed + tm * per_row > vmem_limit:
        tm = max(rows_min, _round_up(tm // 2, rows_min))
    return tm


def _build_call(M, H, tm, out_dtype, x_itemsize, out_itemsize, w_itemsize,
                vmem_limit, use_tanh_gelu, single_buffer_params):
    # Grid-invariant operands (weight / bias / LN vectors) are only fetched
    # once; single-buffering them frees the extra H x H VMEM buffer.
    inv_kwargs = {"pipeline_mode": pl.Buffered(1)} if single_buffer_params else {}
    # Ragged M: last block overhangs (no jnp.pad HBM round trip); OOB rows are
    # masked on store and LN is per-row, so valid rows are unaffected.
    grid = (pl.cdiv(M, tm),)
    cost = pl.CostEstimate(
        flops=2 * M * H * H + 12 * M * H,
        transcendentals=M * H,
        bytes_accessed=M * H * (x_itemsize + out_itemsize) + H * H * w_itemsize + 3 * H * 4,
    )
    kernel = functools.partial(transform_kernel, use_tanh_gelu=use_tanh_gelu)
    return pl.pallas_call(
        kernel,
        out_shape=jax.ShapeDtypeStruct((M, H), out_dtype),
        grid_spec=pltpu.PrefetchScalarGridSpec(
            num_scalar_prefetch=0,
            grid=grid,
            in_specs=[
                pl.BlockSpec((tm, H), lambda i: (i, 0)),               # activation tile
                pl.BlockSpec((H, H), lambda i: (0, 0), **inv_kwargs),  # W^T (resident)
                pl.BlockSpec((1, H), lambda i: (0, 0), **inv_kwargs),  # dense bias
                pl.BlockSpec((1, H), lambda i: (0, 0), **inv_kwargs),  # LN gamma
                pl.BlockSpec((1, H), lambda i: (0, 0), **inv_kwargs),  # LN beta
            ],
            out_specs=pl.BlockSpec((tm, H), lambda i: (i, 0)),
        ),
        compiler_params=pltpu.CompilerParams(
            dimension_semantics=("parallel",),       # independent M tiles -> megacore
            vmem_limit_bytes=vmem_limit,
        ),
        cost_estimate=cost,
    )


def _transform_2d(x2d, prep, *, tm=512, use_tanh_gelu=False):
    M, H = x2d.shape
    w = prep["dense_w_t"]
    x_b = x2d.dtype.itemsize
    o_b = x2d.dtype.itemsize
    w_b = w.dtype.itemsize
    vmem_limit = _vmem_limit_bytes()
    tm_eff = _pick_tile_m(M, H, x_b, o_b, w_b, tm, vmem_limit)
    args = (x2d, w, prep["dense_b"], prep["ln_gamma"], prep["ln_beta"])
    try:
        call = _build_call(M, H, tm_eff, x2d.dtype, x_b, o_b, w_b,
                           vmem_limit, use_tanh_gelu, single_buffer_params=True)
        return call(*args)
    except Exception:
        # Fallback for Pallas versions that do not lower pl.Buffered(1):
        # default double-buffered invariant operands (same numerics).
        call = _build_call(M, H, tm_eff, x2d.dtype, x_b, o_b, w_b,
                           vmem_limit, use_tanh_gelu, single_buffer_params=False)
        return call(*args)


def bert_prediction_head_transform(hidden_states, prepared_params, *, tm=512,
                                   use_tanh_gelu=False):
    """hidden_states: [..., H] -> [..., H] (BertPredictionHeadTransform.forward)."""
    H = hidden_states.shape[-1]
    lead = hidden_states.shape[:-1]
    x2d = hidden_states.reshape(-1, H)
    y2d = _transform_2d(x2d, prepared_params, tm=tm, use_tanh_gelu=use_tanh_gelu)
    return y2d.reshape(*lead, H)


# ----------------------------- pure-JAX reference ------------------------------
def reference(hidden_states, params):
    h = hidden_states @ params["dense_w"].T + params["dense_b"]
    h = h * 0.5 * (1.0 + lax.erf(h / math.sqrt(2.0)))
    mu = jnp.mean(h, axis=-1, keepdims=True)
    var = jnp.mean((h - mu) ** 2, axis=-1, keepdims=True)
    h = (h - mu) / jnp.sqrt(var + 1e-12)
    return h * params["ln_gamma"] + params["ln_beta"]


# ----------------------------- demo / self-test ---------------------------------
if __name__ == "__main__":
    H = 128

    key = jax.random.PRNGKey(0)
    ks = jax.random.split(key, 8)
    params = {
        "dense_w": jax.random.normal(ks[0], (H, H), jnp.float32) * 0.02,
        "dense_b": jax.random.normal(ks[1], (H,), jnp.float32) * 0.02,
        "ln_gamma": jnp.ones((H,), jnp.float32) + 0.1 * jax.random.normal(ks[2], (H,), jnp.float32),
        "ln_beta": 0.1 * jax.random.normal(ks[3], (H,), jnp.float32),
    }

    # case 1: f32 MXU path, tile-aligned M (B*S = 16) — precise comparison
    prep_f32 = prepare_params(params, matmul_dtype=jnp.float32)
    B, S = 2, 8
    x = jax.random.normal(ks[4], (B, S, H), jnp.float32)
    y = jax.block_until_ready(bert_prediction_head_transform(x, prep_f32))
    y_ref = reference(x, params)
    assert y.shape == (B, S, H)
    assert jnp.allclose(y, y_ref, atol=1e-3, rtol=1e-3), \
        float(jnp.max(jnp.abs(y - y_ref)))

    # case 2: default bf16 MXU path, ragged M (B*S = 26) exercises the
    # overhanging (non-padded) last block
    prep_bf16 = prepare_params(params)                 # matmul_dtype defaults to bf16
    B2, S2 = 2, 13
    x2 = jax.random.normal(ks[5], (B2, S2, H), jnp.float32)
    y2 = jax.block_until_ready(bert_prediction_head_transform(x2, prep_bf16))
    y2_ref = reference(x2, params)
    assert y2.shape == (B2, S2, H)
    assert jnp.allclose(y2, y2_ref, atol=5e-2, rtol=5e-2), \
        float(jnp.max(jnp.abs(y2 - y2_ref)))

    # case 3: bf16 activations end-to-end (exercises the 16-row sublane tiling)
    x3 = jax.random.normal(ks[6], (2, 24, H), jnp.float32).astype(jnp.bfloat16)
    y3 = jax.block_until_ready(bert_prediction_head_transform(x3, prep_bf16))
    y3_ref = reference(x3.astype(jnp.float32), params)
    assert y3.dtype == jnp.bfloat16
    assert jnp.allclose(y3.astype(jnp.float32), y3_ref, atol=7e-2, rtol=7e-2), \
        float(jnp.max(jnp.abs(y3.astype(jnp.float32) - y3_ref)))

    print("KERNEL_OK")
</pallas_src>

<mosaic_0001>
module attributes {stable_mosaic.version = 11 : i64} {
  func.func @transform_kernel(%arg0: i32, %arg1: memref<8x128xf32, #tpu.memory_space<vmem>>, %arg2: memref<128x128xf32, #tpu.memory_space<vmem>>, %arg3: memref<1x128xf32, #tpu.memory_space<vmem>>, %arg4: memref<1x128xf32, #tpu.memory_space<vmem>>, %arg5: memref<1x128xf32, #tpu.memory_space<vmem>>, %arg6: memref<8x128xf32, #tpu.memory_space<vmem>>) attributes {dimension_semantics = [#tpu.dimension_semantics<parallel>], iteration_bounds = array<i64: 2>, scalar_prefetch = 0 : i64, scratch_operands = 0 : i64, tpu.core_type = #tpu.core_type<tc>, window_params = [{transform_indices = @transform_0, window_bounds = array<i64: 8, 128>}, {pipeline_mode = #tpu.pipeline_mode<synchronous>, transform_indices = @transform_1, window_bounds = array<i64: 128, 128>}, {pipeline_mode = #tpu.pipeline_mode<synchronous>, transform_indices = @transform_2, window_bounds = array<i64: 1, 128>}, {pipeline_mode = #tpu.pipeline_mode<synchronous>, transform_indices = @transform_3, window_bounds = array<i64: 1, 128>}, {pipeline_mode = #tpu.pipeline_mode<synchronous>, transform_indices = @transform_4, window_bounds = array<i64: 1, 128>}, {transform_indices = @transform_5, window_bounds = array<i64: 8, 128>}]} {
    %c0 = arith.constant 0 : index
    %c0_0 = arith.constant 0 : index
    %0 = vector.load %arg1[%c0, %c0_0] : memref<8x128xf32, #tpu.memory_space<vmem>>, vector<8x128xf32>
    %c0_1 = arith.constant 0 : index
    %c0_2 = arith.constant 0 : index
    %1 = vector.load %arg2[%c0_1, %c0_2] : memref<128x128xf32, #tpu.memory_space<vmem>>, vector<128x128xf32>
    %cst = arith.constant dense<0.000000e+00> : vector<8x128xf32>
    %2 = tpu.matmul %0, %1, %cst {dimension_numbers = #tpu.dot_dimension_numbers<[1], [0], [0], [1], [0, 0, 1, 1], [], []>} : vector<8x128xf32>, vector<128x128xf32>, vector<8x128xf32> -> vector<8x128xf32>
    %c0_3 = arith.constant 0 : index
    %c0_4 = arith.constant 0 : index
    %3 = vector.load %arg3[%c0_3, %c0_4] : memref<1x128xf32, #tpu.memory_space<vmem>>, vector<1x128xf32>
    %4 = vector.broadcast %3 : vector<1x128xf32> to vector<8x128xf32>
    %5 = arith.addf %2, %4 : vector<8x128xf32>
    %cst_5 = arith.constant 5.000000e-01 : f32
    %6 = vector.broadcast %cst_5 : f32 to vector<8x128xf32>
    %7 = arith.mulf %5, %6 : vector<8x128xf32>
    %cst_6 = arith.constant 0.707106769 : f32
    %8 = vector.broadcast %cst_6 : f32 to vector<8x128xf32>
    %9 = arith.mulf %5, %8 : vector<8x128xf32>
    %10 = math.erf %9 : vector<8x128xf32>
    %cst_7 = arith.constant 1.000000e+00 : f32
    %11 = vector.broadcast %cst_7 : f32 to vector<8x128xf32>
    %12 = arith.addf %11, %10 : vector<8x128xf32>
    %13 = arith.mulf %7, %12 : vector<8x128xf32>
    %cst_8 = arith.constant dense<0.000000e+00> : vector<8xf32>
    %14 = vector.multi_reduction <add>, %13, %cst_8 [1] : vector<8x128xf32> to vector<8xf32>
    %15 = vector.shape_cast %14 : vector<8xf32> to vector<8x1xf32>
    %cst_9 = arith.constant 1.280000e+02 : f32
    %16 = vector.broadcast %cst_9 : f32 to vector<8x1xf32>
    %17 = arith.divf %15, %16 : vector<8x1xf32>
    %18 = vector.broadcast %17 : vector<8x1xf32> to vector<8x128xf32>
    %19 = arith.subf %13, %18 : vector<8x128xf32>
    %20 = arith.mulf %19, %19 : vector<8x128xf32>
    %cst_10 = arith.constant dense<0.000000e+00> : vector<8xf32>
    %21 = vector.multi_reduction <add>, %20, %cst_10 [1] : vector<8x128xf32> to vector<8xf32>
    %22 = vector.shape_cast %21 : vector<8xf32> to vector<8x1xf32>
    %cst_11 = arith.constant 1.280000e+02 : f32
    %23 = vector.broadcast %cst_11 : f32 to vector<8x1xf32>
    %24 = arith.divf %22, %23 : vector<8x1xf32>
    %25 = vector.broadcast %17 : vector<8x1xf32> to vector<8x128xf32>
    %26 = arith.subf %13, %25 : vector<8x128xf32>
    %cst_12 = arith.constant 9.99999996E-13 : f32
    %27 = vector.broadcast %cst_12 : f32 to vector<8x1xf32>
    %28 = arith.addf %24, %27 : vector<8x1xf32>
    %29 = math.rsqrt %28 : vector<8x1xf32>
    %30 = vector.broadcast %29 : vector<8x1xf32> to vector<8x128xf32>
    %31 = arith.mulf %26, %30 : vector<8x128xf32>
    %c0_13 = arith.constant 0 : index
    %c0_14 = arith.constant 0 : index
    %32 = vector.load %arg4[%c0_13, %c0_14] : memref<1x128xf32, #tpu.memory_space<vmem>>, vector<1x128xf32>
    %33 = vector.broadcast %32 : vector<1x128xf32> to vector<8x128xf32>
    %34 = arith.mulf %31, %33 : vector<8x128xf32>
    %c0_15 = arith.constant 0 : index
    %c0_16 = arith.constant 0 : index
    %35 = vector.load %arg5[%c0_15, %c0_16] : memref<1x128xf32, #tpu.memory_space<vmem>>, vector<1x128xf32>
    %36 = vector.broadcast %35 : vector<1x128xf32> to vector<8x128xf32>
    %37 = arith.addf %34, %36 : vector<8x128xf32>
    %c0_17 = arith.constant 0 : index
    %c0_18 = arith.constant 0 : index
    %38 = vector.load %arg6[%c0_17, %c0_18] : memref<8x128xf32, #tpu.memory_space<vmem>>, vector<8x128xf32>
    tpu.vector_store %arg6[%c0_17, %c0_18], %37 {strides = array<i32>} : memref<8x128xf32, #tpu.memory_space<vmem>>, vector<8x128xf32>,
    return
  }
  func.func @transform_0(%arg0: i32) -> (i32, i32) {
    %c0_i32 = arith.constant 0 : i32
    %c0_i32_0 = arith.constant 0 : i32
    return %arg0, %c0_i32 : i32, i32
  }
  func.func @transform_1(%arg0: i32) -> (i32, i32) {
    %c0_i32 = arith.constant 0 : i32
    %c0_i32_0 = arith.constant 0 : i32
    %c0_i32_1 = arith.constant 0 : i32
    return %c0_i32, %c0_i32_0 : i32, i32
  }
  func.func @transform_2(%arg0: i32) -> (i32, i32) {
    %c0_i32 = arith.constant 0 : i32
    %c0_i32_0 = arith.constant 0 : i32
    %c0_i32_1 = arith.constant 0 : i32
    return %c0_i32, %c0_i32_0 : i32, i32
  }
  func.func @transform_3(%arg0: i32) -> (i32, i32) {
    %c0_i32 = arith.constant 0 : i32
    %c0_i32_0 = arith.constant 0 : i32
    %c0_i32_1 = arith.constant 0 : i32
    return %c0_i32, %c0_i32_0 : i32, i32
  }
  func.func @transform_4(%arg0: i32) -> (i32, i32) {
    %c0_i32 = arith.constant 0 : i32
    %c0_i32_0 = arith.constant 0 : i32
    %c0_i32_1 = arith.constant 0 : i32
    return %c0_i32, %c0_i32_0 : i32, i32
  }
  func.func @transform_5(%arg0: i32) -> (i32, i32) {
    %c0_i32 = arith.constant 0 : i32
    %c0_i32_0 = arith.constant 0 : i32
    return %arg0, %c0_i32 : i32, i32
  }
}

module attributes {stable_mosaic.version = 11 : i64} {
  func.func @transform_kernel(%arg0: i32, %arg1: memref<8x128xf32, #tpu.memory_space<vmem>>, %arg2: memref<128x128xf32, #tpu.memory_space<vmem>>, %arg3: memref<1x128xf32, #tpu.memory_space<vmem>>, %arg4: memref<1x128xf32, #tpu.memory_space<vmem>>, %arg5: memref<1x128xf32, #tpu.memory_space<vmem>>, %arg6: memref<8x128xf32, #tpu.memory_space<vmem>>) attributes {dimension_semantics = [#tpu.dimension_semantics<parallel>], iteration_bounds = array<i64: 2>, scalar_prefetch = 0 : i64, scratch_operands = 0 : i64, tpu.core_type = #tpu.core_type<tc>, window_params = [{transform_indices = @transform_0, window_bounds = array<i64: 8, 128>}, {pipeline_mode = #tpu.pipeline_mode<synchronous>, transform_indices = @transform_1, window_bounds = array<i64: 128, 128>}, {pipeline_mode = #tpu.pipeline_mode<synchronous>, transform_indices = @transform_2, window_bounds = array<i64: 1, 128>}, {pipeline_mode = #tpu.pipeline_mode<synchronous>, transform_indices = @transform_3, window_bounds = array<i64: 1, 128>}, {pipeline_mode = #tpu.pipeline_mode<synchronous>, transform_indices = @transform_4, window_bounds = array<i64: 1, 128>}, {transform_indices = @transform_5, window_bounds = array<i64: 8, 128>}]} {
    %c0 = arith.constant 0 : index
    %c0_0 = arith.constant 0 : index
    %0 = vector.load %arg1[%c0, %c0_0] : memref<8x128xf32, #tpu.memory_space<vmem>>, vector<8x128xf32>
    %c0_1 = arith.constant 0 : index
    %c0_2 = arith.constant 0 : index
    %1 = vector.load %arg2[%c0_1, %c0_2] : memref<128x128xf32, #tpu.memory_space<vmem>>, vector<128x128xf32>
    %cst = arith.constant dense<0.000000e+00> : vector<8x128xf32>
    %2 = tpu.matmul %0, %1, %cst {dimension_numbers = #tpu.dot_dimension_numbers<[1], [0], [0], [1], [0, 0, 1, 1], [], []>} : vector<8x128xf32>, vector<128x128xf32>, vector<8x128xf32> -> vector<8x128xf32>
    %c0_3 = arith.constant 0 : index
    %c0_4 = arith.constant 0 : index
    %3 = vector.load %arg3[%c0_3, %c0_4] : memref<1x128xf32, #tpu.memory_space<vmem>>, vector<1x128xf32>
    %4 = vector.broadcast %3 : vector<1x128xf32> to vector<8x128xf32>
    %5 = arith.addf %2, %4 : vector<8x128xf32>
    %cst_5 = arith.constant 5.000000e-01 : f32
    %6 = vector.broadcast %cst_5 : f32 to vector<8x128xf32>
    %7 = arith.mulf %5, %6 : vector<8x128xf32>
    %cst_6 = arith.constant 0.707106769 : f32
    %8 = vector.broadcast %cst_6 : f32 to vector<8x128xf32>
    %9 = arith.mulf %5, %8 : vector<8x128xf32>
    %10 = math.erf %9 : vector<8x128xf32>
    %cst_7 = arith.constant 1.000000e+00 : f32
    %11 = vector.broadcast %cst_7 : f32 to vector<8x128xf32>
    %12 = arith.addf %11, %10 : vector<8x128xf32>
    %13 = arith.mulf %7, %12 : vector<8x128xf32>
    %cst_8 = arith.constant dense<0.000000e+00> : vector<8xf32>
    %14 = vector.multi_reduction <add>, %13, %cst_8 [1] : vector<8x128xf32> to vector<8xf32>
    %15 = vector.shape_cast %14 : vector<8xf32> to vector<8x1xf32>
    %cst_9 = arith.constant 1.280000e+02 : f32
    %16 = vector.broadcast %cst_9 : f32 to vector<8x1xf32>
    %17 = arith.divf %15, %16 : vector<8x1xf32>
    %18 = vector.broadcast %17 : vector<8x1xf32> to vector<8x128xf32>
    %19 = arith.subf %13, %18 : vector<8x128xf32>
    %20 = arith.mulf %19, %19 : vector<8x128xf32>
    %cst_10 = arith.constant dense<0.000000e+00> : vector<8xf32>
    %21 = vector.multi_reduction <add>, %20, %cst_10 [1] : vector<8x128xf32> to vector<8xf32>
    %22 = vector.shape_cast %21 : vector<8xf32> to vector<8x1xf32>
    %cst_11 = arith.constant 1.280000e+02 : f32
    %23 = vector.broadcast %cst_11 : f32 to vector<8x1xf32>
    %24 = arith.divf %22, %23 : vector<8x1xf32>
    %25 = vector.broadcast %17 : vector<8x1xf32> to vector<8x128xf32>
    %26 = arith.subf %13, %25 : vector<8x128xf32>
    %cst_12 = arith.constant 9.99999996E-13 : f32
    %27 = vector.broadcast %cst_12 : f32 to vector<8x1xf32>
    %28 = arith.addf %24, %27 : vector<8x1xf32>
    %29 = math.rsqrt %28 : vector<8x1xf32>
    %30 = vector.broadcast %29 : vector<8x1xf32> to vector<8x128xf32>
    %31 = arith.mulf %26, %30 : vector<8x128xf32>
    %c0_13 = arith.constant 0 : index
    %c0_14 = arith.constant 0 : index
    %32 = vector.load %arg4[%c0_13, %c0_14] : memref<1x128xf32, #tpu.memory_space<vmem>>, vector<1x128xf32>
    %33 = vector.broadcast %32 : vector<1x128xf32> to vector<8x128xf32>
    %34 = arith.mulf %31, %33 : vector<8x128xf32>
    %c0_15 = arith.constant 0 : index
    %c0_16 = arith.constant 0 : index
    %35 = vector.load %arg5[%c0_15, %c0_16] : memref<1x128xf32, #tpu.memory_space<vmem>>, vector<1x128xf32>
    %36 = vector.broadcast %35 : vector<1x128xf32> to vector<8x128xf32>
    %37 = arith.addf %34, %36 : vector<8x128xf32>
    %c0_17 = arith.constant 0 : index
    %c0_18 = arith.constant 0 : index
    %38 = vector.load %arg6[%c0_17, %c0_18] : memref<8x128xf32, #tpu.memory_space<vmem>>, vector<8x128xf32>
    tpu.vector_store %arg6[%c0_17, %c0_18], %37 {strides = array<i32>} : memref<8x128xf32, #tpu.memory_space<vmem>>, vector<8x128xf32>,
    return
  }
  func.func @transform_0(%arg0: i32) -> (i32, i32) {
    %c0_i32 = arith.constant 0 : i32
    %c0_i32_0 = arith.constant 0 : i32
    return %arg0, %c0_i32 : i32, i32
  }
  func.func @transform_1(%arg0: i32) -> (i32, i32) {
    %c0_i32 = arith.constant 0 : i32
    %c0_i32_0 = arith.constant 0 : i32
    %c0_i32_1 = arith.constant 0 : i32
    return %c0_i32, %c0_i32_0 : i32, i32
  }
  func.func @transform_2(%arg0: i32) -> (i32, i32) {
    %c0_i32 = arith.constant 0 : i32
    %c0_i32_0 = arith.constant 0 : i32
    %c0_i32_1 = arith.constant 0 : i32
    return %c0_i32, %c0_i32_0 : i32, i32
  }
  func.func @transform_3(%arg0: i32) -> (i32, i32) {
    %c0_i32 = arith.constant 0 : i32
    %c0_i32_0 = arith.constant 0 : i32
    %c0_i32_1 = arith.constant 0 : i32
    return %c0_i32, %c0_i32_0 : i32, i32
  }
  func.func @transform_4(%arg0: i32) -> (i32, i32) {
    %c0_i32 = arith.constant 0 : i32
    %c0_i32_0 = arith.constant 0 : i32
    %c0_i32_1 = arith.constant 0 : i32
    return %c0_i32, %c0_i32_0 : i32, i32
  }
  func.func @transform_5(%arg0: i32) -> (i32, i32) {
    %c0_i32 = arith.constant 0 : i32
    %c0_i32_0 = arith.constant 0 : i32
    return %arg0, %c0_i32 : i32, i32
  }
}

</mosaic_0001>

<llo_original>
// kernel: tpu_custom_call.1
$region0: #{tpu_custom_call.1}
  #allocation0 [shape = 'u32[]', space=smem, size = 0x4, offset = 0x4, fixed_abs, tag = 'smem constant byte address 0x4 - core index']
  #allocation1 [shape = 'u32[144,128]{1,0:T(1,128)}', space=vmem, size = 0x12000, scoped, tag = 'internal scratch']
  %s0 = inlined_call_operand.hbm [shape: f32[16,128], index: 0, kind: input, shape index: {}]
  %s1 = inlined_call_operand.hbm [shape: f32[128,128], index: 1, kind: input, shape index: {}]
  %s2 = inlined_call_operand.vmem [shape: f32[1,128], index: 2, kind: input, shape index: {}]
  %s3 = inlined_call_operand.vmem [shape: f32[1,128], index: 3, kind: input, shape index: {}]
  %s4 = inlined_call_operand.vmem [shape: f32[1,128], index: 4, kind: input, shape index: {}]
  %s5 = inlined_call_operand.hbm [shape: f32[16,128], index: 5, kind: output, shape index: {}]
  %s6 = sld [smem:[#allocation0]]
  $region61: #{tpu_custom_call.1} parent=0
    _
  %s8 = ssub.s32 1, %s6
  %s9 = scalar_select 0, %s8, %s6
  $region1: #{tpu_custom_call.1} parent=0
    #allocation2 [shape = 'u8[8192]{0}', space=vmem, size = 0x2000, scoped, tag = 'input window, operand 0']
    #allocation3 [shape = 's32[2]{0}', space=sflag, size = 0x8, scoped, tag = 'scoped memory for tpu_custom_call.1']
    #allocation4 [shape = 's32[2]{0}', space=sflag, size = 0x8, scoped, tag = 'scoped memory for tpu_custom_call.1']
    #allocation5 [shape = 'u8[65536]{0}', space=vmem, size = 0x10000, scoped, tag = 'input window, operand 1, single buffered']
    #allocation6 [shape = 's32[1]{0}', space=sflag, size = 0x4, scoped, tag = 'scoped memory for tpu_custom_call.1']
    #allocation7 [shape = 'u8[8192]{0}', space=vmem, size = 0x2000, scoped, tag = 'output window, operand 0']
    %10 = vsyncpa [#allocation3], 0
    %s11 = scalar_lea.sflag [#allocation3], 1
    %12 = vsyncpa %s11, 0
    %13 = vsyncpa [#allocation6], 0
    %14 = vsyncpa [#allocation4], 0
    %s15 = scalar_lea.sflag [#allocation4], 1
    %16 = vsyncpa %s15, 0
    loop: start=0, step=1, limit=4
    $region2: #{tpu_custom_call.1} parent=1 // loop_pre_header
      _
    $region3: #{tpu_custom_call.1} parent=1 // loop_header
      %s18 = sphi 0, %s22
      %p19 = scmp.ge.s32.totalorder %s18, 4
      %s28 = sphi 0, %s30
      %s31 = sphi 0, %s28
      %s32 = sphi 0, %s31
      %s48 = sphi 0, %s32
      %s52 = sphi 0, %s52
      %s54 = sphi 0, %s52
      %s55 = sphi 0, %s54
      %s69 = sphi 0, %s55
      %s73 = sphi 0, %s73
      %s75 = sphi 0, %s73
      %s76 = sphi 0, %s75
      %s90 = sphi 0, %s76
      %s94 = sphi 0, %s94
      %s96 = sphi 0, %s94
      %s97 = sphi 0, %s96
      %s111 = sphi 0, %s97
      %s115 = sphi 0, %s115
      %s117 = sphi 0, %s115
      %s118 = sphi 0, %s117
      %s132 = sphi 0, %s118
      %s138 = sphi 0, %s140
      %s141 = sphi 0, %s138
      %s142 = sphi 0, %s141
      %s158 = sphi 0, %s142
    $region4: #{tpu_custom_call.1} parent=1 // loop_header_branch
      %21 = sbr.rel (%p19) target = $region8
    $region5: #{tpu_custom_call.1} parent=1 // loop_body
      %s23 = ssub.s32 %s18, 1
      %s24 = ssub.s32 %s18, 2
      %s25 = sadd.s32 %s18, 1
      %s26 = ssub.s32 %s18, %s25
      %p27 = scmp.eq.s32.totalorder %s26, 0
      %s29 = sadd.s32 %s28, 1
      %s30 = scalar_select %p27, %s28, %s29
      %p33 = pneg %p27
      %p34 = scmp.eq.s32.totalorder %s18, 1
      %p35 = por %p33, %p34
      %p36 = scmp.ne.s32.totalorder %s28, %s31
      %p37 = scmp.eq.s32.totalorder %s18, 0
      %p38 = por %p36, %p37
      %p39 = scmp.ne.s32.totalorder %s28, %s31
      %p40 = scmp.eq.s32.totalorder %s23, 1
      %p41 = por %p39, %p40
      %p42 = scmp.ne.s32.totalorder %s31, %s32
      %p43 = scmp.eq.s32.totalorder %s23, 0
      %p44 = por %p42, %p43
      %p45 = scmp.ne.s32.totalorder %s31, %s32
      %p46 = scmp.eq.s32.totalorder %s24, 1
      %p47 = por %p45, %p46
      %p49 = scmp.ne.s32.totalorder %s32, %s48
      %p50 = scmp.eq.s32.totalorder %s24, 0
      %p51 = por %p49, %p50
      %s53 = sadd.s32 %s52, 1
      %p56 = scmp.eq.s32.totalorder %s18, 1
      %p57 = scmp.ne.s32.totalorder %s52, %s54
      %p58 = scmp.eq.s32.totalorder %s18, 0
      %p59 = por %p57, %p58
      %p60 = scmp.ne.s32.totalorder %s52, %s54
      %p61 = scmp.eq.s32.totalorder %s23, 1
      %p62 = por %p60, %p61
      %p63 = scmp.ne.s32.totalorder %s54, %s55
      %p64 = scmp.eq.s32.totalorder %s23, 0
      %p65 = por %p63, %p64
      %p66 = scmp.ne.s32.totalorder %s54, %s55
      %p67 = scmp.eq.s32.totalorder %s24, 1
      %p68 = por %p66, %p67
      %p70 = scmp.ne.s32.totalorder %s55, %s69
      %p71 = scmp.eq.s32.totalorder %s24, 0
      %p72 = por %p70, %p71
      %s74 = sadd.s32 %s73, 1
      %p77 = scmp.eq.s32.totalorder %s18, 1
      %p78 = scmp.ne.s32.totalorder %s73, %s75
      %p79 = scmp.eq.s32.totalorder %s18, 0
      %p80 = por %p78, %p79
      %p81 = scmp.ne.s32.totalorder %s73, %s75
      %p82 = scmp.eq.s32.totalorder %s23, 1
      %p83 = por %p81, %p82
      %p84 = scmp.ne.s32.totalorder %s75, %s76
      %p85 = scmp.eq.s32.totalorder %s23, 0
      %p86 = por %p84, %p85
      %p87 = scmp.ne.s32.totalorder %s75, %s76
      %p88 = scmp.eq.s32.totalorder %s24, 1
      %p89 = por %p87, %p88
      %p91 = scmp.ne.s32.totalorder %s76, %s90
      %p92 = scmp.eq.s32.totalorder %s24, 0
      %p93 = por %p91, %p92
      %s95 = sadd.s32 %s94, 1
      %p98 = scmp.eq.s32.totalorder %s18, 1
      %p99 = scmp.ne.s32.totalorder %s94, %s96
      %p100 = scmp.eq.s32.totalorder %s18, 0
      %p101 = por %p99, %p100
      %p102 = scmp.ne.s32.totalorder %s94, %s96
      %p103 = scmp.eq.s32.totalorder %s23, 1
      %p104 = por %p102, %p103
      %p105 = scmp.ne.s32.totalorder %s96, %s97
      %p106 = scmp.eq.s32.totalorder %s23, 0
      %p107 = por %p105, %p106
      %p108 = scmp.ne.s32.totalorder %s96, %s97
      %p109 = scmp.eq.s32.totalorder %s24, 1
      %p110 = por %p108, %p109
      %p112 = scmp.ne.s32.totalorder %s97, %s111
      %p113 = scmp.eq.s32.totalorder %s24, 0
      %p114 = por %p112, %p113
      %s116 = sadd.s32 %s115, 1
      %p119 = scmp.eq.s32.totalorder %s18, 1
      %p120 = scmp.ne.s32.totalorder %s115, %s117
      %p121 = scmp.eq.s32.totalorder %s18, 0
      %p122 = por %p120, %p121
      %p123 = scmp.ne.s32.totalorder %s115, %s117
      %p124 = scmp.eq.s32.totalorder %s23, 1
      %p125 = por %p123, %p124
      %p126 = scmp.ne.s32.totalorder %s117, %s118
      %p127 = scmp.eq.s32.totalorder %s23, 0
      %p128 = por %p126, %p127
      %p129 = scmp.ne.s32.totalorder %s117, %s118
      %p130 = scmp.eq.s32.totalorder %s24, 1
      %p131 = por %p129, %p130
      %p133 = scmp.ne.s32.totalorder %s118, %s132
      %p134 = scmp.eq.s32.totalorder %s24, 0
      %p135 = por %p133, %p134
      %s136 = ssub.s32 %s18, %s25
      %p137 = scmp.eq.s32.totalorder %s136, 0
      %s139 = sadd.s32 %s138, 1
      %s140 = scalar_select %p137, %s138, %s139
      %p143 = pneg %p137
      %p144 = scmp.eq.s32.totalorder %s18, 1
      %p145 = por %p143, %p144
      %p146 = scmp.ne.s32.totalorder %s138, %s141
      %p147 = scmp.eq.s32.totalorder %s18, 0
      %p148 = por %p146, %p147
      %p149 = scmp.ne.s32.totalorder %s138, %s141
      %p150 = scmp.eq.s32.totalorder %s23, 1
      %p151 = por %p149, %p150
      %p152 = scmp.ne.s32.totalorder %s141, %s142
      %p153 = scmp.eq.s32.totalorder %s23, 0
      %p154 = por %p152, %p153
      %p155 = scmp.ne.s32.totalorder %s141, %s142
      %p156 = scmp.eq.s32.totalorder %s24, 1
      %p157 = por %p155, %p156
      %p159 = scmp.ne.s32.totalorder %s142, %s158
      %p160 = scmp.eq.s32.totalorder %s24, 0
      %p161 = por %p159, %p160
      %p162 = scmp.le.s32.totalorder 1, %s18
      %p163 = scmp.lt.s32.totalorder %s18, 3
      %p164 = pnand %p162, %p163
      %p165 = pneg %p164
      // Predicated region
      $region9: #{tpu_custom_call.1} parent=5 // pred_check
        _
      $region10: #{tpu_custom_call.1} parent=5 // pred_check_branch
        %167 = sbr.rel (%p164) target = $region12
      $region11: #{tpu_custom_call.1} parent=5 // pred_region
        %s168 = ssub.s32 %s18, 1
        // Predicated region
        $region13: #{tpu_custom_call.1} parent=11 // pred_check
          %p169 = pneg %p65
        $region14: #{tpu_custom_call.1} parent=11 // pred_check_branch
          %171 = sbr.rel (%p169) target = $region16
        $region15: #{tpu_custom_call.1} parent=11 // pred_region
          %s173 = ssub.s32 2048, 2048
          %174 = vsyncadd [#allocation6], %s173
          %s175 = sshll.u32 [#allocation5], 4
          %s176 = int_to_ptr.vmem [resolvable:$true] %s175
          %181 = dma.hbm_to_vmem [thread:$0]  %s1, 2048, %s176, [#allocation6], 128, 128, 8
        $region16: #{tpu_custom_call.1} parent=11 // pred_fallthru
          _
        // Predicated region
        $region17: #{tpu_custom_call.1} parent=11 // pred_check
          %p182 = pneg %p86
        $region18: #{tpu_custom_call.1} parent=11 // pred_check_branch
          %184 = sbr.rel (%p182) target = $region20
        $region19: #{tpu_custom_call.1} parent=11 // pred_region
          _
        $region20: #{tpu_custom_call.1} parent=11 // pred_fallthru
          _
        // Predicated region
        $region21: #{tpu_custom_call.1} parent=11 // pred_check
          %p185 = pneg %p107
        $region22: #{tpu_custom_call.1} parent=11 // pred_check_branch
          %187 = sbr.rel (%p185) target = $region24
        $region23: #{tpu_custom_call.1} parent=11 // pred_region
          _
        $region24: #{tpu_custom_call.1} parent=11 // pred_fallthru
          _
        // Predicated region
        $region25: #{tpu_custom_call.1} parent=11 // pred_check
          %p188 = pneg %p128
        $region26: #{tpu_custom_call.1} parent=11 // pred_check_branch
          %190 = sbr.rel (%p188) target = $region28
        $region27: #{tpu_custom_call.1} parent=11 // pred_region
          _
        $region28: #{tpu_custom_call.1} parent=11 // pred_fallthru
          _
      $region12: #{tpu_custom_call.1} parent=5 // pred_fallthru
        _
      %p191 = scmp.lt.s32.totalorder %s18, 2
      // Predicated region
      $region29: #{tpu_custom_call.1} parent=5 // pred_check
        %p192 = pneg %p191
      $region30: #{tpu_custom_call.1} parent=5 // pred_check_branch
        %194 = sbr.rel (%p192) target = $region32
      $region31: #{tpu_custom_call.1} parent=5 // pred_region
        // Predicated region
        $region33: #{tpu_custom_call.1} parent=31 // pred_check
          %p195 = pneg %p38
        $region34: #{tpu_custom_call.1} parent=31 // pred_check_branch
          %197 = sbr.rel (%p195) target = $region36
        $region35: #{tpu_custom_call.1} parent=31 // pred_region
          %s198 = sand.u32 %s28, 1
          %s199 = scalar_lea.sflag [#allocation3], %s198
          %s200 = sand.u32 %s28, 1
          %s201 = smul.addr %s200, 8
          %s202 = scalar_lea.vmem [#allocation2], %s201
          %s204 = ssub.s32 128, 128
          %205 = vsyncadd %s199, %s204
          %s206 = smul.addr %s18, 128
          %s207 = scalar_lea.hbm %s0, %s206
          %s209 = sshll.u32 %s202, 4
          %s210 = int_to_ptr.vmem [resolvable:$true] %s209
          %212 = dma.hbm_to_vmem [thread:$0]  %s207, 128, %s210, %s199
        $region36: #{tpu_custom_call.1} parent=31 // pred_fallthru
          _
      $region32: #{tpu_custom_call.1} parent=5 // pred_fallthru
        _
      %p213 = scmp.le.s32.totalorder 1, %s18
      %p214 = scmp.lt.s32.totalorder %s18, 3
      %p215 = pnand %p213, %p214
      %p216 = pneg %p215
      // Predicated region
      $region37: #{tpu_custom_call.1} parent=5 // pred_check
        _
      $region38: #{tpu_custom_call.1} parent=5 // pred_check_branch
        %218 = sbr.rel (%p215) target = $region40
      $region39: #{tpu_custom_call.1} parent=5 // pred_region
        %s219 = ssub.s32 %s18, 1
        %s220 = sand.u32 %s31, 1
        %s221 = scalar_lea.sflag [#allocation3], %s220
        %s222 = sand.u32 %s31, 1
        %s223 = smul.addr %s222, 8
        %s224 = scalar_lea.vmem [#allocation2], %s223
        // Predicated region
        $region41: #{tpu_custom_call.1} parent=39 // pred_check
          %p225 = pneg %p44
        $region42: #{tpu_custom_call.1} parent=39 // pred_check_branch
          %227 = sbr.rel (%p225) target = $region44
        $region43: #{tpu_custom_call.1} parent=39 // pred_region
          %228 = dma.done %s221, 128
        $region44: #{tpu_custom_call.1} parent=39 // pred_fallthru
          _
        // Predicated region
        $region45: #{tpu_custom_call.1} parent=39 // pred_check
          %p229 = pneg %p65
        $region46: #{tpu_custom_call.1} parent=39 // pred_check_branch
          %231 = sbr.rel (%p229) target = $region48
        $region47: #{tpu_custom_call.1} parent=39 // pred_region
          %232 = dma.done [#allocation6], 2048
        $region48: #{tpu_custom_call.1} parent=39 // pred_fallthru
          _
        %s233 = sand.u32 %s31, 1
        %s234 = scalar_lea.sflag [#allocation3], %s233
        %s235 = sand.u32 %s31, 1
        %s236 = smul.addr %s235, 8
        %s237 = scalar_lea.vmem [#allocation2], %s236
        %p238 = pneg %p44
        %p239 = pneg %p41
        %p240 = pneg %p65
        %p241 = pneg %p62
        %p242 = pneg %p86
        %p243 = pneg %p83
        %p244 = pneg %p107
        %p245 = pneg %p104
        %p246 = pneg %p128
        %p247 = pneg %p125
        %p248 = pneg %p154
        %p249 = pneg %p151
        %s250 = sand.u32 %s141, 1
        %s251 = scalar_lea.sflag [#allocation4], %s250
        %s252 = sand.u32 %s141, 1
        %s253 = smul.addr %s252, 8
        %s254 = scalar_lea.vmem [#allocation7], %s253
        %v255 = vld [vmem:[%s224] sm:$0xff]
        %v256 = vld [vmem:[#allocation5] sm:$0xff]
        %v257 = vld [vmem:[#allocation5 + $0x8] sm:$0xff]
        %v258 = vld [vmem:[#allocation5 + $0x10] sm:$0xff]
        %v259 = vld [vmem:[#allocation5 + $0x18] sm:$0xff]
        %v260 = vld [vmem:[#allocation5 + $0x20] sm:$0xff]
        %v261 = vld [vmem:[#allocation5 + $0x28] sm:$0xff]
        %v262 = vld [vmem:[#allocation5 + $0x30] sm:$0xff]
        %v263 = vld [vmem:[#allocation5 + $0x38] sm:$0xff]
        %v264 = vld [vmem:[#allocation5 + $0x40] sm:$0xff]
        %v265 = vld [vmem:[#allocation5 + $0x48] sm:$0xff]
        %v266 = vld [vmem:[#allocation5 + $0x50] sm:$0xff]
        %v267 = vld [vmem:[#allocation5 + $0x58] sm:$0xff]
        %v268 = vld [vmem:[#allocation5 + $0x60] sm:$0xff]
        %v269 = vld [vmem:[#allocation5 + $0x68] sm:$0xff]
        %v270 = vld [vmem:[#allocation5 + $0x70] sm:$0xff]
        %v271 = vld [vmem:[#allocation5 + $0x78] sm:$0xff]
        %v272 = vld [vmem:[%s2] sm:$0x1]
        %v274 = vlaneseq
        %v275 = vshrl.u32 %v274, 7
        %v276 = vsub.s32 0, %v275
        %v277 = vrot.slane %v272, %v276
        %279 = vmatprep.subr.mxu0 0.0
        %280 = vmatpush1.msra.mxu0 %v271
        %281 = vmatprep.subr.mxu0 0.0
        %282 = vmatpush1.msra.mxu0 %v270
        %283 = vmatprep.subr.mxu0 0.0
        %284 = vmatpush1.msra.mxu0 %v269
        %285 = vmatprep.subr.mxu0 0.0
        %286 = vmatpush1.msra.mxu0 %v268
        %287 = vmatprep.subr.mxu0 0.0
        %288 = vmatpush1.msra.mxu0 %v267
        %289 = vmatprep.subr.mxu0 0.0
        %290 = vmatpush1.msra.mxu0 %v266
        %291 = vmatprep.subr.mxu0 0.0
        %292 = vmatpush1.msra.mxu0 %v265
        %293 = vmatprep.subr.mxu0 0.0
        %294 = vmatpush1.msra.mxu0 %v264
        %295 = vmatprep.subr.mxu0 0.0
        %296 = vmatpush1.msra.mxu0 %v263
        %297 = vmatprep.subr.mxu0 0.0
        %298 = vmatpush1.msra.mxu0 %v262
        %299 = vmatprep.subr.mxu0 0.0
        %300 = vmatpush1.msra.mxu0 %v261
        %301 = vmatprep.subr.mxu0 0.0
        %302 = vmatpush1.msra.mxu0 %v260
        %303 = vmatprep.subr.mxu0 0.0
        %304 = vmatpush1.msra.mxu0 %v259
        %305 = vmatprep.subr.mxu0 0.0
        %306 = vmatpush1.msra.mxu0 %v258
        %307 = vmatprep.subr.mxu0 0.0
        %308 = vmatpush1.msra.mxu0 %v257
        %309 = vmatprep.subr.mxu0 0.0
        %310 = vmatpush1.msra.mxu0 %v256
        %311 = vmatprep.subr.mxu0 0.0
        %312 = vmatpush2.msra.mxu0 0.0
        %313 = vmatprep.subr.mxu0 0.0
        %314 = vmatpush2.msra.mxu0 0.0
        %315 = vmatprep.subr.mxu0 0.0
        %316 = vmatpush2.msra.mxu0 0.0
        %317 = vmatprep.subr.mxu0 0.0
        %318 = vmatpush2.msra.mxu0 0.0
        %319 = vmatprep.subr.mxu0 0.0
        %320 = vmatpush2.msra.mxu0 0.0
        %321 = vmatprep.subr.mxu0 0.0
        %322 = vmatpush2.msra.mxu0 0.0
        %323 = vmatprep.subr.mxu0 0.0
        %324 = vmatpush2.msra.mxu0 0.0
        %325 = vmatprep.subr.mxu0 0.0
        %326 = vmatpush2.msra.mxu0 0.0
        %327 = vmatprep.subr.mxu0 0.0
        %328 = vmatpush2.msra.mxu0 0.0
        %329 = vmatprep.subr.mxu0 0.0
        %330 = vmatpush2.msra.mxu0 0.0
        %331 = vmatprep.subr.mxu0 0.0
        %332 = vmatpush2.msra.mxu0 0.0
        %333 = vmatprep.subr.mxu0 0.0
        %334 = vmatpush2.msra.mxu0 0.0
        %335 = vmatprep.subr.mxu0 0.0
        %336 = vmatpush2.msra.mxu0 0.0
        %337 = vmatprep.subr.mxu0 0.0
        %338 = vmatpush2.msra.mxu0 0.0
        %339 = vmatprep.subr.mxu0 0.0
        %340 = vmatpush2.msra.mxu0 0.0
        %341 = vmatprep.subr.mxu0 0.0
        %342 = vmatpush2.msra.mxu0 0.0
        %343 = vmatprep.mubr.f32.mxu0 0.0
        %344 = vmatmul.mubr.f32.gmra.mxu0 %v255
        %v345 = vpop.f32.mrf.mxu0
        %v346 = vadd.f32 %v277, %v345
        %v347 = vpop.f32.mrf.mxu0
        %348 = vdwg.mxu0
        %v349 = vmul.f32 %v346, 0.5
        %v350 = vmul.f32 %v346, 0.70710677
        %v351 = verf.f32.pop %v350
        %v352 = vadd.f32 %v351, 1.0
        %v353 = vmul.f32 %v349, %v352
        %354 = vadd.xlane.f32.xlu0 %v353
        %v355 = vpop.xlane.xlu0 %354
        %v356 = vrcp.pop 128.0
        %v357 = vmul.f32 %v355, %v356
        %v358 = vsub.f32 %v353, %v357
        %v359 = vmul.f32 %v358, %v358
        %360 = vadd.xlane.f32.xlu0 %v359
        %v361 = vpop.xlane.xlu0 %360
        %v362 = vmul.f32 %v361, %v356
        %v363 = vadd.f32 %v362, 1e-12
        %v364 = vrsqrt.pop %v363
        %v365 = vmul.f32 %v358, %v364
        %v366 = vld [vmem:[%s3] sm:$0x1]
        %v368 = vlaneseq
        %v369 = vshrl.u32 %v368, 7
        %v370 = vsub.s32 0, %v369
        %v371 = vrot.slane %v366, %v370
        %v373 = vmul.f32 %v365, %v371
        %v374 = vld [vmem:[%s4] sm:$0x1]
        %v376 = vlaneseq
        %v377 = vshrl.u32 %v376, 7
        %v378 = vsub.s32 0, %v377
        %v379 = vrot.slane %v374, %v378
        %v381 = vadd.f32 %v373, %v379
        %382 = vst [vmem:[%s254] sm:$0xff] %v381
        %s383 = sand.u32 %s141, 1
        %s384 = scalar_lea.sflag [#allocation4], %s383
        %s385 = sand.u32 %s141, 1
        %s386 = smul.addr %s385, 8
        %s387 = scalar_lea.vmem [#allocation7], %s386
        // Predicated region
        $region49: #{tpu_custom_call.1} parent=39 // pred_check
          %p388 = pneg %p151
        $region50: #{tpu_custom_call.1} parent=39 // pred_check_branch
          %390 = sbr.rel (%p388) target = $region52
        $region51: #{tpu_custom_call.1} parent=39 // pred_region
          %s392 = ssub.s32 128, 128
          %393 = vsyncadd %s384, %s392
          %s394 = smul.addr %s23, 128
          %s395 = scalar_lea.hbm %s5, %s394
          %s397 = sshll.u32 %s387, 4
          %s398 = int_to_ptr.vmem [resolvable:$true] %s397
          %400 = dma.vmem_to_hbm [thread:$0]  %s398, 128, %s395, %s384
        $region52: #{tpu_custom_call.1} parent=39 // pred_fallthru
          _
      $region40: #{tpu_custom_call.1} parent=5 // pred_fallthru
        _
      %p401 = scmp.le.s32.totalorder 2, %s18
      // Predicated region
      $region53: #{tpu_custom_call.1} parent=5 // pred_check
        %p402 = pneg %p401
      $region54: #{tpu_custom_call.1} parent=5 // pred_check_branch
        %404 = sbr.rel (%p402) target = $region56
      $region55: #{tpu_custom_call.1} parent=5 // pred_region
        %s405 = ssub.s32 %s18, 2
        // Predicated region
        $region57: #{tpu_custom_call.1} parent=55 // pred_check
          %p406 = pneg %p157
        $region58: #{tpu_custom_call.1} parent=55 // pred_check_branch
          %408 = sbr.rel (%p406) target = $region60
        $region59: #{tpu_custom_call.1} parent=55 // pred_region
          %s409 = sand.u32 %s142, 1
          %s410 = scalar_lea.sflag [#allocation4], %s409
          %s411 = sand.u32 %s142, 1
          %s412 = smul.addr %s411, 8
          %s413 = scalar_lea.vmem [#allocation7], %s412
          %414 = dma.done %s410, 128
        $region60: #{tpu_custom_call.1} parent=55 // pred_fallthru
          _
      $region56: #{tpu_custom_call.1} parent=5 // pred_fallthru
        _
    $region6: #{tpu_custom_call.1} parent=1 // loop_footer
      %s22 = sadd.s32 1, %s18
    $region7: #{tpu_custom_call.1} parent=1 // loop_footer_branch
      %17 = sbr.rel target = $region3
    $region8: #{tpu_custom_call.1} parent=1 // loop_exit
      _
    %415 = vsyncpa [#allocation3], 1
    %s416 = scalar_lea.sflag [#allocation3], 1
    %417 = vsyncpa %s416, 1
    %418 = vsyncpa [#allocation6], 1
    %419 = vsyncpa [#allocation4], 1
    %s420 = scalar_lea.sflag [#allocation4], 1
    %421 = vsyncpa %s420, 1

// kernel: tpu_custom_call.1
$region0: #{tpu_custom_call.1}
  #allocation0 [shape = 'u32[]', space=smem, size = 0x4, offset = 0x4, fixed_abs, tag = 'smem constant byte address 0x4 - core index']
  #allocation1 [shape = 'u32[144,128]{1,0:T(1,128)}', space=vmem, size = 0x12000, scoped, tag = 'internal scratch']
  %s0 = inlined_call_operand.hbm [shape: f32[16,128], index: 0, kind: input, shape index: {}]
  %s1 = inlined_call_operand.hbm [shape: f32[128,128], index: 1, kind: input, shape index: {}]
  %s2 = inlined_call_operand.vmem [shape: f32[1,128], index: 2, kind: input, shape index: {}]
  %s3 = inlined_call_operand.vmem [shape: f32[1,128], index: 3, kind: input, shape index: {}]
  %s4 = inlined_call_operand.vmem [shape: f32[1,128], index: 4, kind: input, shape index: {}]
  %s5 = inlined_call_operand.hbm [shape: f32[16,128], index: 5, kind: output, shape index: {}]
  %s6 = sld [smem:[#allocation0]]
  $region61: #{tpu_custom_call.1} parent=0
    _
  %s8 = ssub.s32 1, %s6
  %s9 = scalar_select 0, %s8, %s6
  $region1: #{tpu_custom_call.1} parent=0
    #allocation2 [shape = 'u8[8192]{0}', space=vmem, size = 0x2000, scoped, tag = 'input window, operand 0']
    #allocation3 [shape = 's32[2]{0}', space=sflag, size = 0x8, scoped, tag = 'scoped memory for tpu_custom_call.1']
    #allocation4 [shape = 's32[2]{0}', space=sflag, size = 0x8, scoped, tag = 'scoped memory for tpu_custom_call.1']
    #allocation5 [shape = 'u8[65536]{0}', space=vmem, size = 0x10000, scoped, tag = 'input window, operand 1, single buffered']
    #allocation6 [shape = 's32[1]{0}', space=sflag, size = 0x4, scoped, tag = 'scoped memory for tpu_custom_call.1']
    #allocation7 [shape = 'u8[8192]{0}', space=vmem, size = 0x2000, scoped, tag = 'output window, operand 0']
    %10 = vsyncpa [#allocation3], 0
    %s11 = scalar_lea.sflag [#allocation3], 1
    %12 = vsyncpa %s11, 0
    %13 = vsyncpa [#allocation6], 0
    %14 = vsyncpa [#allocation4], 0
    %s15 = scalar_lea.sflag [#allocation4], 1
    %16 = vsyncpa %s15, 0
    loop: start=0, step=1, limit=4
    $region2: #{tpu_custom_call.1} parent=1 // loop_pre_header
      _
    $region3: #{tpu_custom_call.1} parent=1 // loop_header
      %s18 = sphi 0, %s22
      %p19 = scmp.ge.s32.totalorder %s18, 4
      %s28 = sphi 0, %s30
      %s31 = sphi 0, %s28
      %s32 = sphi 0, %s31
      %s48 = sphi 0, %s32
      %s52 = sphi 0, %s52
      %s54 = sphi 0, %s52
      %s55 = sphi 0, %s54
      %s69 = sphi 0, %s55
      %s73 = sphi 0, %s73
      %s75 = sphi 0, %s73
      %s76 = sphi 0, %s75
      %s90 = sphi 0, %s76
      %s94 = sphi 0, %s94
      %s96 = sphi 0, %s94
      %s97 = sphi 0, %s96
      %s111 = sphi 0, %s97
      %s115 = sphi 0, %s115
      %s117 = sphi 0, %s115
      %s118 = sphi 0, %s117
      %s132 = sphi 0, %s118
      %s138 = sphi 0, %s140
      %s141 = sphi 0, %s138
      %s142 = sphi 0, %s141
      %s158 = sphi 0, %s142
    $region4: #{tpu_custom_call.1} parent=1 // loop_header_branch
      %21 = sbr.rel (%p19) target = $region8
    $region5: #{tpu_custom_call.1} parent=1 // loop_body
      %s23 = ssub.s32 %s18, 1
      %s24 = ssub.s32 %s18, 2
      %s25 = sadd.s32 %s18, 1
      %s26 = ssub.s32 %s18, %s25
      %p27 = scmp.eq.s32.totalorder %s26, 0
      %s29 = sadd.s32 %s28, 1
      %s30 = scalar_select %p27, %s28, %s29
      %p33 = pneg %p27
      %p34 = scmp.eq.s32.totalorder %s18, 1
      %p35 = por %p33, %p34
      %p36 = scmp.ne.s32.totalorder %s28, %s31
      %p37 = scmp.eq.s32.totalorder %s18, 0
      %p38 = por %p36, %p37
      %p39 = scmp.ne.s32.totalorder %s28, %s31
      %p40 = scmp.eq.s32.totalorder %s23, 1
      %p41 = por %p39, %p40
      %p42 = scmp.ne.s32.totalorder %s31, %s32
      %p43 = scmp.eq.s32.totalorder %s23, 0
      %p44 = por %p42, %p43
      %p45 = scmp.ne.s32.totalorder %s31, %s32
      %p46 = scmp.eq.s32.totalorder %s24, 1
      %p47 = por %p45, %p46
      %p49 = scmp.ne.s32.totalorder %s32, %s48
      %p50 = scmp.eq.s32.totalorder %s24, 0
      %p51 = por %p49, %p50
      %s53 = sadd.s32 %s52, 1
      %p56 = scmp.eq.s32.totalorder %s18, 1
      %p57 = scmp.ne.s32.totalorder %s52, %s54
      %p58 = scmp.eq.s32.totalorder %s18, 0
      %p59 = por %p57, %p58
      %p60 = scmp.ne.s32.totalorder %s52, %s54
      %p61 = scmp.eq.s32.totalorder %s23, 1
      %p62 = por %p60, %p61
      %p63 = scmp.ne.s32.totalorder %s54, %s55
      %p64 = scmp.eq.s32.totalorder %s23, 0
      %p65 = por %p63, %p64
      %p66 = scmp.ne.s32.totalorder %s54, %s55
      %p67 = scmp.eq.s32.totalorder %s24, 1
      %p68 = por %p66, %p67
      %p70 = scmp.ne.s32.totalorder %s55, %s69
      %p71 = scmp.eq.s32.totalorder %s24, 0
      %p72 = por %p70, %p71
      %s74 = sadd.s32 %s73, 1
      %p77 = scmp.eq.s32.totalorder %s18, 1
      %p78 = scmp.ne.s32.totalorder %s73, %s75
      %p79 = scmp.eq.s32.totalorder %s18, 0
      %p80 = por %p78, %p79
      %p81 = scmp.ne.s32.totalorder %s73, %s75
      %p82 = scmp.eq.s32.totalorder %s23, 1
      %p83 = por %p81, %p82
      %p84 = scmp.ne.s32.totalorder %s75, %s76
      %p85 = scmp.eq.s32.totalorder %s23, 0
      %p86 = por %p84, %p85
      %p87 = scmp.ne.s32.totalorder %s75, %s76
      %p88 = scmp.eq.s32.totalorder %s24, 1
      %p89 = por %p87, %p88
      %p91 = scmp.ne.s32.totalorder %s76, %s90
      %p92 = scmp.eq.s32.totalorder %s24, 0
      %p93 = por %p91, %p92
      %s95 = sadd.s32 %s94, 1
      %p98 = scmp.eq.s32.totalorder %s18, 1
      %p99 = scmp.ne.s32.totalorder %s94, %s96
      %p100 = scmp.eq.s32.totalorder %s18, 0
      %p101 = por %p99, %p100
      %p102 = scmp.ne.s32.totalorder %s94, %s96
      %p103 = scmp.eq.s32.totalorder %s23, 1
      %p104 = por %p102, %p103
      %p105 = scmp.ne.s32.totalorder %s96, %s97
      %p106 = scmp.eq.s32.totalorder %s23, 0
      %p107 = por %p105, %p106
      %p108 = scmp.ne.s32.totalorder %s96, %s97
      %p109 = scmp.eq.s32.totalorder %s24, 1
      %p110 = por %p108, %p109
      %p112 = scmp.ne.s32.totalorder %s97, %s111
      %p113 = scmp.eq.s32.totalorder %s24, 0
      %p114 = por %p112, %p113
      %s116 = sadd.s32 %s115, 1
      %p119 = scmp.eq.s32.totalorder %s18, 1
      %p120 = scmp.ne.s32.totalorder %s115, %s117
      %p121 = scmp.eq.s32.totalorder %s18, 0
      %p122 = por %p120, %p121
      %p123 = scmp.ne.s32.totalorder %s115, %s117
      %p124 = scmp.eq.s32.totalorder %s23, 1
      %p125 = por %p123, %p124
      %p126 = scmp.ne.s32.totalorder %s117, %s118
      %p127 = scmp.eq.s32.totalorder %s23, 0
      %p128 = por %p126, %p127
      %p129 = scmp.ne.s32.totalorder %s117, %s118
      %p130 = scmp.eq.s32.totalorder %s24, 1
      %p131 = por %p129, %p130
      %p133 = scmp.ne.s32.totalorder %s118, %s132
      %p134 = scmp.eq.s32.totalorder %s24, 0
      %p135 = por %p133, %p134
      %s136 = ssub.s32 %s18, %s25
      %p137 = scmp.eq.s32.totalorder %s136, 0
      %s139 = sadd.s32 %s138, 1
      %s140 = scalar_select %p137, %s138, %s139
      %p143 = pneg %p137
      %p144 = scmp.eq.s32.totalorder %s18, 1
      %p145 = por %p143, %p144
      %p146 = scmp.ne.s32.totalorder %s138, %s141
      %p147 = scmp.eq.s32.totalorder %s18, 0
      %p148 = por %p146, %p147
      %p149 = scmp.ne.s32.totalorder %s138, %s141
      %p150 = scmp.eq.s32.totalorder %s23, 1
      %p151 = por %p149, %p150
      %p152 = scmp.ne.s32.totalorder %s141, %s142
      %p153 = scmp.eq.s32.totalorder %s23, 0
      %p154 = por %p152, %p153
      %p155 = scmp.ne.s32.totalorder %s141, %s142
      %p156 = scmp.eq.s32.totalorder %s24, 1
      %p157 = por %p155, %p156
      %p159 = scmp.ne.s32.totalorder %s142, %s158
      %p160 = scmp.eq.s32.totalorder %s24, 0
      %p161 = por %p159, %p160
      %p162 = scmp.le.s32.totalorder 1, %s18
      %p163 = scmp.lt.s32.totalorder %s18, 3
      %p164 = pnand %p162, %p163
      %p165 = pneg %p164
      // Predicated region
      $region9: #{tpu_custom_call.1} parent=5 // pred_check
        _
      $region10: #{tpu_custom_call.1} parent=5 // pred_check_branch
        %167 = sbr.rel (%p164) target = $region12
      $region11: #{tpu_custom_call.1} parent=5 // pred_region
        %s168 = ssub.s32 %s18, 1
        // Predicated region
        $region13: #{tpu_custom_call.1} parent=11 // pred_check
          %p169 = pneg %p65
        $region14: #{tpu_custom_call.1} parent=11 // pred_check_branch
          %171 = sbr.rel (%p169) target = $region16
        $region15: #{tpu_custom_call.1} parent=11 // pred_region
          %s173 = ssub.s32 2048, 2048
          %174 = vsyncadd [#allocation6], %s173
          %s175 = sshll.u32 [#allocation5], 4
          %s176 = int_to_ptr.vmem [resolvable:$true] %s175
          %181 = dma.hbm_to_vmem [thread:$0]  %s1, 2048, %s176, [#allocation6], 128, 128, 8
        $region16: #{tpu_custom_call.1} parent=11 // pred_fallthru
          _
        // Predicated region
        $region17: #{tpu_custom_call.1} parent=11 // pred_check
          %p182 = pneg %p86
        $region18: #{tpu_custom_call.1} parent=11 // pred_check_branch
          %184 = sbr.rel (%p182) target = $region20
        $region19: #{tpu_custom_call.1} parent=11 // pred_region
          _
        $region20: #{tpu_custom_call.1} parent=11 // pred_fallthru
          _
        // Predicated region
        $region21: #{tpu_custom_call.1} parent=11 // pred_check
          %p185 = pneg %p107
        $region22: #{tpu_custom_call.1} parent=11 // pred_check_branch
          %187 = sbr.rel (%p185) target = $region24
        $region23: #{tpu_custom_call.1} parent=11 // pred_region
          _
        $region24: #{tpu_custom_call.1} parent=11 // pred_fallthru
          _
        // Predicated region
        $region25: #{tpu_custom_call.1} parent=11 // pred_check
          %p188 = pneg %p128
        $region26: #{tpu_custom_call.1} parent=11 // pred_check_branch
          %190 = sbr.rel (%p188) target = $region28
        $region27: #{tpu_custom_call.1} parent=11 // pred_region
          _
        $region28: #{tpu_custom_call.1} parent=11 // pred_fallthru
          _
      $region12: #{tpu_custom_call.1} parent=5 // pred_fallthru
        _
      %p191 = scmp.lt.s32.totalorder %s18, 2
      // Predicated region
      $region29: #{tpu_custom_call.1} parent=5 // pred_check
        %p192 = pneg %p191
      $region30: #{tpu_custom_call.1} parent=5 // pred_check_branch
        %194 = sbr.rel (%p192) target = $region32
      $region31: #{tpu_custom_call.1} parent=5 // pred_region
        // Predicated region
        $region33: #{tpu_custom_call.1} parent=31 // pred_check
          %p195 = pneg %p38
        $region34: #{tpu_custom_call.1} parent=31 // pred_check_branch
          %197 = sbr.rel (%p195) target = $region36
        $region35: #{tpu_custom_call.1} parent=31 // pred_region
          %s198 = sand.u32 %s28, 1
          %s199 = scalar_lea.sflag [#allocation3], %s198
          %s200 = sand.u32 %s28, 1
          %s201 = smul.addr %s200, 8
          %s202 = scalar_lea.vmem [#allocation2], %s201
          %s204 = ssub.s32 128, 128
          %205 = vsyncadd %s199, %s204
          %s206 = smul.addr %s18, 128
          %s207 = scalar_lea.hbm %s0, %s206
          %s209 = sshll.u32 %s202, 4
          %s210 = int_to_ptr.vmem [resolvable:$true] %s209
          %212 = dma.hbm_to_vmem [thread:$0]  %s207, 128, %s210, %s199
        $region36: #{tpu_custom_call.1} parent=31 // pred_fallthru
          _
      $region32: #{tpu_custom_call.1} parent=5 // pred_fallthru
        _
      %p213 = scmp.le.s32.totalorder 1, %s18
      %p214 = scmp.lt.s32.totalorder %s18, 3
      %p215 = pnand %p213, %p214
      %p216 = pneg %p215
      // Predicated region
      $region37: #{tpu_custom_call.1} parent=5 // pred_check
        _
      $region38: #{tpu_custom_call.1} parent=5 // pred_check_branch
        %218 = sbr.rel (%p215) target = $region40
      $region39: #{tpu_custom_call.1} parent=5 // pred_region
        %s219 = ssub.s32 %s18, 1
        %s220 = sand.u32 %s31, 1
        %s221 = scalar_lea.sflag [#allocation3], %s220
        %s222 = sand.u32 %s31, 1
        %s223 = smul.addr %s222, 8
        %s224 = scalar_lea.vmem [#allocation2], %s223
        // Predicated region
        $region41: #{tpu_custom_call.1} parent=39 // pred_check
          %p225 = pneg %p44
        $region42: #{tpu_custom_call.1} parent=39 // pred_check_branch
          %227 = sbr.rel (%p225) target = $region44
        $region43: #{tpu_custom_call.1} parent=39 // pred_region
          %228 = dma.done %s221, 128
        $region44: #{tpu_custom_call.1} parent=39 // pred_fallthru
          _
        // Predicated region
        $region45: #{tpu_custom_call.1} parent=39 // pred_check
          %p229 = pneg %p65
        $region46: #{tpu_custom_call.1} parent=39 // pred_check_branch
          %231 = sbr.rel (%p229) target = $region48
        $region47: #{tpu_custom_call.1} parent=39 // pred_region
          %232 = dma.done [#allocation6], 2048
        $region48: #{tpu_custom_call.1} parent=39 // pred_fallthru
          _
        %s233 = sand.u32 %s31, 1
        %s234 = scalar_lea.sflag [#allocation3], %s233
        %s235 = sand.u32 %s31, 1
        %s236 = smul.addr %s235, 8
        %s237 = scalar_lea.vmem [#allocation2], %s236
        %p238 = pneg %p44
        %p239 = pneg %p41
        %p240 = pneg %p65
        %p241 = pneg %p62
        %p242 = pneg %p86
        %p243 = pneg %p83
        %p244 = pneg %p107
        %p245 = pneg %p104
        %p246 = pneg %p128
        %p247 = pneg %p125
        %p248 = pneg %p154
        %p249 = pneg %p151
        %s250 = sand.u32 %s141, 1
        %s251 = scalar_lea.sflag [#allocation4], %s250
        %s252 = sand.u32 %s141, 1
        %s253 = smul.addr %s252, 8
        %s254 = scalar_lea.vmem [#allocation7], %s253
        %v255 = vld [vmem:[%s224] sm:$0xff]
        %v256 = vld [vmem:[#allocation5] sm:$0xff]
        %v257 = vld [vmem:[#allocation5 + $0x8] sm:$0xff]
        %v258 = vld [vmem:[#allocation5 + $0x10] sm:$0xff]
        %v259 = vld [vmem:[#allocation5 + $0x18] sm:$0xff]
        %v260 = vld [vmem:[#allocation5 + $0x20] sm:$0xff]
        %v261 = vld [vmem:[#allocation5 + $0x28] sm:$0xff]
        %v262 = vld [vmem:[#allocation5 + $0x30] sm:$0xff]
        %v263 = vld [vmem:[#allocation5 + $0x38] sm:$0xff]
        %v264 = vld [vmem:[#allocation5 + $0x40] sm:$0xff]
        %v265 = vld [vmem:[#allocation5 + $0x48] sm:$0xff]
        %v266 = vld [vmem:[#allocation5 + $0x50] sm:$0xff]
        %v267 = vld [vmem:[#allocation5 + $0x58] sm:$0xff]
        %v268 = vld [vmem:[#allocation5 + $0x60] sm:$0xff]
        %v269 = vld [vmem:[#allocation5 + $0x68] sm:$0xff]
        %v270 = vld [vmem:[#allocation5 + $0x70] sm:$0xff]
        %v271 = vld [vmem:[#allocation5 + $0x78] sm:$0xff]
        %v272 = vld [vmem:[%s2] sm:$0x1]
        %v274 = vlaneseq
        %v275 = vshrl.u32 %v274, 7
        %v276 = vsub.s32 0, %v275
        %v277 = vrot.slane %v272, %v276
        %279 = vmatprep.subr.mxu0 0.0
        %280 = vmatpush1.msra.mxu0 %v271
        %281 = vmatprep.subr.mxu0 0.0
        %282 = vmatpush1.msra.mxu0 %v270
        %283 = vmatprep.subr.mxu0 0.0
        %284 = vmatpush1.msra.mxu0 %v269
        %285 = vmatprep.subr.mxu0 0.0
        %286 = vmatpush1.msra.mxu0 %v268
        %287 = vmatprep.subr.mxu0 0.0
        %288 = vmatpush1.msra.mxu0 %v267
        %289 = vmatprep.subr.mxu0 0.0
        %290 = vmatpush1.msra.mxu0 %v266
        %291 = vmatprep.subr.mxu0 0.0
        %292 = vmatpush1.msra.mxu0 %v265
        %293 = vmatprep.subr.mxu0 0.0
        %294 = vmatpush1.msra.mxu0 %v264
        %295 = vmatprep.subr.mxu0 0.0
        %296 = vmatpush1.msra.mxu0 %v263
        %297 = vmatprep.subr.mxu0 0.0
        %298 = vmatpush1.msra.mxu0 %v262
        %299 = vmatprep.subr.mxu0 0.0
        %300 = vmatpush1.msra.mxu0 %v261
        %301 = vmatprep.subr.mxu0 0.0
        %302 = vmatpush1.msra.mxu0 %v260
        %303 = vmatprep.subr.mxu0 0.0
        %304 = vmatpush1.msra.mxu0 %v259
        %305 = vmatprep.subr.mxu0 0.0
        %306 = vmatpush1.msra.mxu0 %v258
        %307 = vmatprep.subr.mxu0 0.0
        %308 = vmatpush1.msra.mxu0 %v257
        %309 = vmatprep.subr.mxu0 0.0
        %310 = vmatpush1.msra.mxu0 %v256
        %311 = vmatprep.subr.mxu0 0.0
        %312 = vmatpush2.msra.mxu0 0.0
        %313 = vmatprep.subr.mxu0 0.0
        %314 = vmatpush2.msra.mxu0 0.0
        %315 = vmatprep.subr.mxu0 0.0
        %316 = vmatpush2.msra.mxu0 0.0
        %317 = vmatprep.subr.mxu0 0.0
        %318 = vmatpush2.msra.mxu0 0.0
        %319 = vmatprep.subr.mxu0 0.0
        %320 = vmatpush2.msra.mxu0 0.0
        %321 = vmatprep.subr.mxu0 0.0
        %322 = vmatpush2.msra.mxu0 0.0
        %323 = vmatprep.subr.mxu0 0.0
        %324 = vmatpush2.msra.mxu0 0.0
        %325 = vmatprep.subr.mxu0 0.0
        %326 = vmatpush2.msra.mxu0 0.0
        %327 = vmatprep.subr.mxu0 0.0
        %328 = vmatpush2.msra.mxu0 0.0
        %329 = vmatprep.subr.mxu0 0.0
        %330 = vmatpush2.msra.mxu0 0.0
        %331 = vmatprep.subr.mxu0 0.0
        %332 = vmatpush2.msra.mxu0 0.0
        %333 = vmatprep.subr.mxu0 0.0
        %334 = vmatpush2.msra.mxu0 0.0
        %335 = vmatprep.subr.mxu0 0.0
        %336 = vmatpush2.msra.mxu0 0.0
        %337 = vmatprep.subr.mxu0 0.0
        %338 = vmatpush2.msra.mxu0 0.0
        %339 = vmatprep.subr.mxu0 0.0
        %340 = vmatpush2.msra.mxu0 0.0
        %341 = vmatprep.subr.mxu0 0.0
        %342 = vmatpush2.msra.mxu0 0.0
        %343 = vmatprep.mubr.f32.mxu0 0.0
        %344 = vmatmul.mubr.f32.gmra.mxu0 %v255
        %v345 = vpop.f32.mrf.mxu0
        %v346 = vadd.f32 %v277, %v345
        %v347 = vpop.f32.mrf.mxu0
        %348 = vdwg.mxu0
        %v349 = vmul.f32 %v346, 0.5
        %v350 = vmul.f32 %v346, 0.70710677
        %v351 = verf.f32.pop %v350
        %v352 = vadd.f32 %v351, 1.0
        %v353 = vmul.f32 %v349, %v352
        %354 = vadd.xlane.f32.xlu0 %v353
        %v355 = vpop.xlane.xlu0 %354
        %v356 = vrcp.pop 128.0
        %v357 = vmul.f32 %v355, %v356
        %v358 = vsub.f32 %v353, %v357
        %v359 = vmul.f32 %v358, %v358
        %360 = vadd.xlane.f32.xlu0 %v359
        %v361 = vpop.xlane.xlu0 %360
        %v362 = vmul.f32 %v361, %v356
        %v363 = vadd.f32 %v362, 1e-12
        %v364 = vrsqrt.pop %v363
        %v365 = vmul.f32 %v358, %v364
        %v366 = vld [vmem:[%s3] sm:$0x1]
        %v368 = vlaneseq
        %v369 = vshrl.u32 %v368, 7
        %v370 = vsub.s32 0, %v369
        %v371 = vrot.slane %v366, %v370
        %v373 = vmul.f32 %v365, %v371
        %v374 = vld [vmem:[%s4] sm:$0x1]
        %v376 = vlaneseq
        %v377 = vshrl.u32 %v376, 7
        %v378 = vsub.s32 0, %v377
        %v379 = vrot.slane %v374, %v378
        %v381 = vadd.f32 %v373, %v379
        %382 = vst [vmem:[%s254] sm:$0xff] %v381
        %s383 = sand.u32 %s141, 1
        %s384 = scalar_lea.sflag [#allocation4], %s383
        %s385 = sand.u32 %s141, 1
        %s386 = smul.addr %s385, 8
        %s387 = scalar_lea.vmem [#allocation7], %s386
        // Predicated region
        $region49: #{tpu_custom_call.1} parent=39 // pred_check
          %p388 = pneg %p151
        $region50: #{tpu_custom_call.1} parent=39 // pred_check_branch
          %390 = sbr.rel (%p388) target = $region52
        $region51: #{tpu_custom_call.1} parent=39 // pred_region
          %s392 = ssub.s32 128, 128
          %393 = vsyncadd %s384, %s392
          %s394 = smul.addr %s23, 128
          %s395 = scalar_lea.hbm %s5, %s394
          %s397 = sshll.u32 %s387, 4
          %s398 = int_to_ptr.vmem [resolvable:$true] %s397
          %400 = dma.vmem_to_hbm [thread:$0]  %s398, 128, %s395, %s384
        $region52: #{tpu_custom_call.1} parent=39 // pred_fallthru
          _
      $region40: #{tpu_custom_call.1} parent=5 // pred_fallthru
        _
      %p401 = scmp.le.s32.totalorder 2, %s18
      // Predicated region
      $region53: #{tpu_custom_call.1} parent=5 // pred_check
        %p402 = pneg %p401
      $region54: #{tpu_custom_call.1} parent=5 // pred_check_branch
        %404 = sbr.rel (%p402) target = $region56
      $region55: #{tpu_custom_call.1} parent=5 // pred_region
        %s405 = ssub.s32 %s18, 2
        // Predicated region
        $region57: #{tpu_custom_call.1} parent=55 // pred_check
          %p406 = pneg %p157
        $region58: #{tpu_custom_call.1} parent=55 // pred_check_branch
          %408 = sbr.rel (%p406) target = $region60
        $region59: #{tpu_custom_call.1} parent=55 // pred_region
          %s409 = sand.u32 %s142, 1
          %s410 = scalar_lea.sflag [#allocation4], %s409
          %s411 = sand.u32 %s142, 1
          %s412 = smul.addr %s411, 8
          %s413 = scalar_lea.vmem [#allocation7], %s412
          %414 = dma.done %s410, 128
        $region60: #{tpu_custom_call.1} parent=55 // pred_fallthru
          _
      $region56: #{tpu_custom_call.1} parent=5 // pred_fallthru
        _
    $region6: #{tpu_custom_call.1} parent=1 // loop_footer
      %s22 = sadd.s32 1, %s18
    $region7: #{tpu_custom_call.1} parent=1 // loop_footer_branch
      %17 = sbr.rel target = $region3
    $region8: #{tpu_custom_call.1} parent=1 // loop_exit
      _
    %415 = vsyncpa [#allocation3], 1
    %s416 = scalar_lea.sflag [#allocation3], 1
    %417 = vsyncpa %s416, 1
    %418 = vsyncpa [#allocation6], 1
    %419 = vsyncpa [#allocation4], 1
    %s420 = scalar_lea.sflag [#allocation4], 1
    %421 = vsyncpa %s420, 1

</llo_original>
